<compile_context>
chip_gen: v7x
topology: tpu7x:2x2x1
jax: 0.10.0
libtpu: 0.0.40
codegen_flags: <defaults>
</compile_context>

<pallas_src>
import jax
import jax.numpy as jnp
from jax import lax
from jax.experimental import pallas as pl
from jax.experimental.pallas import tpu as pltpu


def _round_up(x, m):
    return (x + m - 1) // m * m


def _embeddings_kernel(ids_ref,     # VMEM (T, 1) int32 : item id per flat token
                       pos_ref,     # VMEM (T, 1) int32 : V + position index per flat token
                       table_ref,   # VMEM (Kt, H)      : tile of [item_table; pos_table]
                       w_ref,       # VMEM (1, H) f32   : LN weight
                       b_ref,       # VMEM (1, H) f32   : LN bias
                       out_ref):    # VMEM (T, H) f32   : output block (doubles as accumulator)
    k = pl.program_id(1)
    nk = pl.num_programs(1)
    T, H = out_ref.shape
    Kt = table_ref.shape[0]

    @pl.when(k == 0)
    def _():
        out_ref[...] = jnp.zeros_like(out_ref)

    # --- one-hot gather of item + positional rows, fused into one MXU matmul ---
    row0 = k * Kt
    iota = lax.broadcasted_iota(jnp.int32, (T, Kt), 1) + row0        # global row ids
    onehot = jnp.logical_or(iota == ids_ref[...], iota == pos_ref[...])
    onehot = onehot.astype(jnp.float32)                              # (T, Kt)
    out_ref[...] += jnp.dot(onehot,
                            table_ref[...].astype(jnp.float32),
                            preferred_element_type=jnp.float32,
                            precision=lax.Precision.HIGHEST)

    # --- LayerNorm (TF style) + identity dropout on the last vocab tile -------
    @pl.when(k == nk - 1)
    def _():
        x = out_ref[...]                                             # (T, H) f32
        u = jnp.mean(x, axis=-1, keepdims=True)
        xc = x - u
        var = jnp.mean(xc * xc, axis=-1, keepdims=True)
        y = xc * lax.rsqrt(var + 1e-12)
        out_ref[...] = (w_ref[...] * y + b_ref[...]).astype(out_ref.dtype)


def embeddings_forward(input_ids, item_table, pos_table, ln_weight, ln_bias,
                       *, token_tile=256, vocab_tile=512):
    """input_ids: (B, S) int32 -> (B, S, H) float32."""
    B, S = input_ids.shape
    V, H = item_table.shape
    L = pos_table.shape[0]
    assert S <= L, "sequence length exceeds max_seq_length of the position table"

    # --- flatten & pad the token axis -----------------------------------------
    N = B * S
    T = min(token_tile, _round_up(N, 8))
    N_pad = _round_up(N, T)

    ids_flat = input_ids.reshape(-1).astype(jnp.int32)
    pos_flat = jnp.tile(jnp.arange(S, dtype=jnp.int32), B) + V   # offset into combined table
    if N_pad > N:
        pad = N_pad - N
        ids_flat = jnp.concatenate([ids_flat, jnp.zeros((pad,), jnp.int32)])
        pos_flat = jnp.concatenate([pos_flat, jnp.full((pad,), V, jnp.int32)])
    ids2d = ids_flat.reshape(N_pad, 1)
    pos2d = pos_flat.reshape(N_pad, 1)

    # --- combined (item ++ position) table, padded to a multiple of the K tile -
    rows = V + L
    Kt = min(vocab_tile, _round_up(rows, 8))
    rows_pad = _round_up(rows, Kt)
    table = jnp.concatenate([item_table, pos_table], axis=0)
    if rows_pad > rows:
        table = jnp.concatenate(
            [table, jnp.zeros((rows_pad - rows, H), table.dtype)], axis=0)

    w2d = ln_weight.reshape(1, H).astype(jnp.float32)
    b2d = ln_bias.reshape(1, H).astype(jnp.float32)

    grid = (N_pad // T, rows_pad // Kt)   # (token tiles [parallel], vocab tiles [reduction])

    # --- explicit VMEM budget from the (layout-padded) block sizes ------------
    def _padded_bytes(r, c, itemsize):
        return _round_up(r, 8) * _round_up(c, 128) * itemsize

    block_bytes = (2 * _padded_bytes(T, 1, 4)                       # ids + pos
                   + _padded_bytes(Kt, H, table.dtype.itemsize)     # table tile
                   + 2 * _padded_bytes(1, H, 4)                     # LN weight + bias
                   + _padded_bytes(T, H, 4))                        # output / accumulator
    vmem_limit = min(3 * block_bytes + (16 << 20), 64 << 20)

    out = pl.pallas_call(
        _embeddings_kernel,
        out_shape=jax.ShapeDtypeStruct((N_pad, H), jnp.float32),
        grid_spec=pltpu.PrefetchScalarGridSpec(
            num_scalar_prefetch=0,
            grid=grid,
            in_specs=[
                pl.BlockSpec((T, 1), lambda i, k: (i, 0)),    # item ids
                pl.BlockSpec((T, 1), lambda i, k: (i, 0)),    # position ids (offset by V)
                pl.BlockSpec((Kt, H), lambda i, k: (k, 0)),   # combined table tile
                pl.BlockSpec((1, H), lambda i, k: (0, 0)),    # LN weight
                pl.BlockSpec((1, H), lambda i, k: (0, 0)),    # LN bias
            ],
            out_specs=pl.BlockSpec((T, H), lambda i, k: (i, 0)),
        ),
        compiler_params=pltpu.CompilerParams(
            dimension_semantics=("parallel", "arbitrary"),
            vmem_limit_bytes=int(vmem_limit),
        ),
    )(ids2d, pos2d, table, w2d, b2d)

    return out[:N].reshape(B, S, H)


def embeddings_reference(input_ids, item_table, pos_table, ln_weight, ln_bias):
    """Pure-JAX reference of the PyTorch forward (eval mode)."""
    B, S = input_ids.shape
    items = item_table[input_ids]                       # (B, S, H)
    pos = pos_table[jnp.arange(S)][None, :, :]          # (1, S, H)
    x = items + pos
    u = jnp.mean(x, axis=-1, keepdims=True)
    s = jnp.mean((x - u) ** 2, axis=-1, keepdims=True)
    x = (x - u) / jnp.sqrt(s + 1e-12)
    return ln_weight * x + ln_bias


if __name__ == "__main__":
    # Small, deterministic config (mirrors args.item_size / hidden_size / max_seq_length)
    B, S, H = 2, 8, 32
    ITEM_SIZE = 50
    MAX_SEQ_LEN = 16

    key = jax.random.PRNGKey(0)
    k_items, k_pos, k_ids = jax.random.split(key, 3)

    # nn.Embedding-style init; padding_idx=0 -> row 0 zeroed.
    item_table = jax.random.normal(k_items, (ITEM_SIZE, H), dtype=jnp.float32) * 0.02
    item_table = item_table.at[0].set(0.0)
    pos_table = jax.random.normal(k_pos, (MAX_SEQ_LEN, H), dtype=jnp.float32) * 0.02

    # LayerNorm params: weight=1, bias=0
    ln_weight = jnp.ones((H,), dtype=jnp.float32)
    ln_bias = jnp.zeros((H,), dtype=jnp.float32)

    # Input ids in [0, ITEM_SIZE); include some padding zeros.
    input_ids = jax.random.randint(k_ids, (B, S), 0, ITEM_SIZE, dtype=jnp.int32)
    input_ids = input_ids.at[0, 0].set(0)

    out = embeddings_forward(input_ids, item_table, pos_table, ln_weight, ln_bias)
    out = jax.block_until_ready(out)

    ref = embeddings_reference(input_ids, item_table, pos_table, ln_weight, ln_bias)
    assert out.shape == (B, S, H)
    assert jnp.allclose(out, ref, atol=1e-5, rtol=1e-5), "mismatch vs reference"

    print("KERNEL_OK")
</pallas_src>

<mosaic_0001>
module attributes {stable_mosaic.version = 11 : i64} {
  func.func @_embeddings_kernel(%arg0: i32, %arg1: i32, %arg2: memref<16x1xi32, #tpu.memory_space<vmem>>, %arg3: memref<16x1xi32, #tpu.memory_space<vmem>>, %arg4: memref<72x32xf32, #tpu.memory_space<vmem>>, %arg5: memref<1x32xf32, #tpu.memory_space<vmem>>, %arg6: memref<1x32xf32, #tpu.memory_space<vmem>>, %arg7: memref<16x32xf32, #tpu.memory_space<vmem>>) attributes {dimension_semantics = [#tpu.dimension_semantics<parallel>, #tpu.dimension_semantics<arbitrary>], iteration_bounds = array<i64: 1, 1>, scalar_prefetch = 0 : i64, scratch_operands = 0 : i64, tpu.core_type = #tpu.core_type<tc>, window_params = [{transform_indices = @transform_0, window_bounds = array<i64: 16, 1>}, {transform_indices = @transform_1, window_bounds = array<i64: 16, 1>}, {transform_indices = @transform_2, window_bounds = array<i64: 72, 32>}, {pipeline_mode = #tpu.pipeline_mode<synchronous>, transform_indices = @transform_3, window_bounds = array<i64: 1, 32>}, {pipeline_mode = #tpu.pipeline_mode<synchronous>, transform_indices = @transform_4, window_bounds = array<i64: 1, 32>}, {transform_indices = @transform_5, window_bounds = array<i64: 16, 32>}]} {
    %c0_i32 = arith.constant 0 : i32
    %0 = arith.cmpi eq, %arg1, %c0_i32 : i32
    %1 = arith.extui %0 : i1 to i32
    %c0_i32_0 = arith.constant 0 : i32
    %2 = arith.cmpi ne, %1, %c0_i32_0 : i32
    scf.if %2 {
      %cst_12 = arith.constant 0.000000e+00 : f32
      %24 = vector.broadcast %cst_12 : f32 to vector<16x32xf32>
      %c0_13 = arith.constant 0 : index
      %c0_14 = arith.constant 0 : index
      %25 = vector.load %arg7[%c0_13, %c0_14] : memref<16x32xf32, #tpu.memory_space<vmem>>, vector<16x32xf32>
      tpu.vector_store %arg7[%c0_13, %c0_14], %24 {strides = array<i32>} : memref<16x32xf32, #tpu.memory_space<vmem>>, vector<16x32xf32>,
    } else {
    }
    %c72_i32 = arith.constant 72 : i32
    %3 = arith.muli %arg1, %c72_i32 : i32
    %4 = tpu.iota {dimensions = array<i32: 1>} : vector<16x72xi32>
    %5 = vector.broadcast %3 : i32 to vector<16x72xi32>
    %6 = arith.addi %4, %5 : vector<16x72xi32>
    %c0 = arith.constant 0 : index
    %c0_1 = arith.constant 0 : index
    %7 = vector.load %arg2[%c0, %c0_1] : memref<16x1xi32, #tpu.memory_space<vmem>>, vector<16x1xi32>
    %8 = vector.broadcast %7 : vector<16x1xi32> to vector<16x72xi32>
    %9 = arith.cmpi eq, %6, %8 : vector<16x72xi32>
    %c0_2 = arith.constant 0 : index
    %c0_3 = arith.constant 0 : index
    %10 = vector.load %arg3[%c0_2, %c0_3] : memref<16x1xi32, #tpu.memory_space<vmem>>, vector<16x1xi32>
    %11 = vector.broadcast %10 : vector<16x1xi32> to vector<16x72xi32>
    %12 = arith.cmpi eq, %6, %11 : vector<16x72xi32>
    %13 = arith.ori %9, %12 : vector<16x72xi1>
    %14 = arith.extui %13 : vector<16x72xi1> to vector<16x72xi32>
    %15 = arith.sitofp %14 : vector<16x72xi32> to vector<16x72xf32>
    %c0_4 = arith.constant 0 : index
    %c0_5 = arith.constant 0 : index
    %16 = vector.load %arg7[%c0_4, %c0_5] : memref<16x32xf32, #tpu.memory_space<vmem>>, vector<16x32xf32>
    %c0_6 = arith.constant 0 : index
    %c0_7 = arith.constant 0 : index
    %17 = vector.load %arg4[%c0_6, %c0_7] : memref<72x32xf32, #tpu.memory_space<vmem>>, vector<72x32xf32>
    %cst = arith.constant dense<0.000000e+00> : vector<16x32xf32>
    %18 = tpu.matmul %15, %17, %cst {dimension_numbers = #tpu.dot_dimension_numbers<[1], [0], [0], [1], [0, 0, 1, 1], [], []>, precision = #tpu.contract_precision<fp32>} : vector<16x72xf32>, vector<72x32xf32>, vector<16x32xf32> -> vector<16x32xf32>
    %19 = arith.addf %16, %18 : vector<16x32xf32>
    %c0_8 = arith.constant 0 : index
    %c0_9 = arith.constant 0 : index
    %20 = vector.load %arg7[%c0_8, %c0_9] : memref<16x32xf32, #tpu.memory_space<vmem>>, vector<16x32xf32>
    tpu.vector_store %arg7[%c0_8, %c0_9], %19 {strides = array<i32>} : memref<16x32xf32, #tpu.memory_space<vmem>>, vector<16x32xf32>,
    %c0_i32_10 = arith.constant 0 : i32
    %21 = arith.cmpi eq, %arg1, %c0_i32_10 : i32
    %22 = arith.extui %21 : i1 to i32
    %c0_i32_11 = arith.constant 0 : i32
    %23 = arith.cmpi ne, %22, %c0_i32_11 : i32
    scf.if %23 {
      %c0_12 = arith.constant 0 : index
      %c0_13 = arith.constant 0 : index
      %24 = vector.load %arg7[%c0_12, %c0_13] : memref<16x32xf32, #tpu.memory_space<vmem>>, vector<16x32xf32>
      %cst_14 = arith.constant dense<0.000000e+00> : vector<16xf32>
      %25 = vector.multi_reduction <add>, %24, %cst_14 [1] : vector<16x32xf32> to vector<16xf32>
      %26 = vector.shape_cast %25 : vector<16xf32> to vector<16x1xf32>
      %cst_15 = arith.constant 3.200000e+01 : f32
      %27 = vector.broadcast %cst_15 : f32 to vector<16x1xf32>
      %28 = arith.divf %26, %27 : vector<16x1xf32>
      %29 = vector.broadcast %28 : vector<16x1xf32> to vector<16x32xf32>
      %30 = arith.subf %24, %29 : vector<16x32xf32>
      %31 = arith.mulf %30, %30 : vector<16x32xf32>
      %cst_16 = arith.constant dense<0.000000e+00> : vector<16xf32>
      %32 = vector.multi_reduction <add>, %31, %cst_16 [1] : vector<16x32xf32> to vector<16xf32>
      %33 = vector.shape_cast %32 : vector<16xf32> to vector<16x1xf32>
      %cst_17 = arith.constant 3.200000e+01 : f32
      %34 = vector.broadcast %cst_17 : f32 to vector<16x1xf32>
      %35 = arith.divf %33, %34 : vector<16x1xf32>
      %cst_18 = arith.constant 9.99999996E-13 : f32
      %36 = vector.broadcast %cst_18 : f32 to vector<16x1xf32>
      %37 = arith.addf %35, %36 : vector<16x1xf32>
      %38 = math.rsqrt %37 : vector<16x1xf32>
      %39 = vector.broadcast %38 : vector<16x1xf32> to vector<16x32xf32>
      %40 = arith.mulf %30, %39 : vector<16x32xf32>
      %c0_19 = arith.constant 0 : index
      %c0_20 = arith.constant 0 : index
      %41 = vector.load %arg5[%c0_19, %c0_20] : memref<1x32xf32, #tpu.memory_space<vmem>>, vector<1x32xf32>
      %42 = vector.broadcast %41 : vector<1x32xf32> to vector<16x32xf32>
      %43 = arith.mulf %42, %40 : vector<16x32xf32>
      %c0_21 = arith.constant 0 : index
      %c0_22 = arith.constant 0 : index
      %44 = vector.load %arg6[%c0_21, %c0_22] : memref<1x32xf32, #tpu.memory_space<vmem>>, vector<1x32xf32>
      %45 = vector.broadcast %44 : vector<1x32xf32> to vector<16x32xf32>
      %46 = arith.addf %43, %45 : vector<16x32xf32>
      %c0_23 = arith.constant 0 : index
      %c0_24 = arith.constant 0 : index
      %47 = vector.load %arg7[%c0_23, %c0_24] : memref<16x32xf32, #tpu.memory_space<vmem>>, vector<16x32xf32>
      tpu.vector_store %arg7[%c0_23, %c0_24], %46 {strides = array<i32>} : memref<16x32xf32, #tpu.memory_space<vmem>>, vector<16x32xf32>,
    } else {
    }
    return
  }
  func.func @transform_0(%arg0: i32, %arg1: i32) -> (i32, i32) {
    %c0_i32 = arith.constant 0 : i32
    %c0_i32_0 = arith.constant 0 : i32
    return %arg0, %c0_i32 : i32, i32
  }
  func.func @transform_1(%arg0: i32, %arg1: i32) -> (i32, i32) {
    %c0_i32 = arith.constant 0 : i32
    %c0_i32_0 = arith.constant 0 : i32
    return %arg0, %c0_i32 : i32, i32
  }
  func.func @transform_2(%arg0: i32, %arg1: i32) -> (i32, i32) {
    %c0_i32 = arith.constant 0 : i32
    %c0_i32_0 = arith.constant 0 : i32
    return %arg1, %c0_i32 : i32, i32
  }
  func.func @transform_3(%arg0: i32, %arg1: i32) -> (i32, i32) {
    %c0_i32 = arith.constant 0 : i32
    %c0_i32_0 = arith.constant 0 : i32
    %c0_i32_1 = arith.constant 0 : i32
    return %c0_i32, %c0_i32_0 : i32, i32
  }
  func.func @transform_4(%arg0: i32, %arg1: i32) -> (i32, i32) {
    %c0_i32 = arith.constant 0 : i32
    %c0_i32_0 = arith.constant 0 : i32
    %c0_i32_1 = arith.constant 0 : i32
    return %c0_i32, %c0_i32_0 : i32, i32
  }
  func.func @transform_5(%arg0: i32, %arg1: i32) -> (i32, i32) {
    %c0_i32 = arith.constant 0 : i32
    %c0_i32_0 = arith.constant 0 : i32
    return %arg0, %c0_i32 : i32, i32
  }
}

</mosaic_0001>

<llo_original>
// kernel: tpu_custom_call.1
$region0: #{tpu_custom_call.1}
  #allocation0 [shape = 'u32[]', space=smem, size = 0x4, offset = 0x4, fixed_abs, tag = 'smem constant byte address 0x4 - core index']
  #allocation1 [shape = 'u32[144,128]{1,0:T(1,128)}', space=vmem, size = 0x12000, scoped, tag = 'internal scratch']
  %s0 = inlined_call_operand.vmem [shape: s32[16,1], index: 0, kind: input, shape index: {}]
  %s1 = inlined_call_operand.vmem [shape: s32[16,1], index: 1, kind: input, shape index: {}]
  %s2 = inlined_call_operand.vmem [shape: f32[72,32], index: 2, kind: input, shape index: {}]
  %s3 = inlined_call_operand.vmem [shape: f32[1,32], index: 3, kind: input, shape index: {}]
  %s4 = inlined_call_operand.vmem [shape: f32[1,32], index: 4, kind: input, shape index: {}]
  %s5 = inlined_call_operand.hbm [shape: f32[16,32], index: 5, kind: output, shape index: {}]
  %s6 = sld [smem:[#allocation0]]
  $region38: #{tpu_custom_call.1} parent=0
    _
  %s8 = ssub.s32 1, %s6
  %s9 = scalar_select 0, %s8, %s6
  $region1: #{tpu_custom_call.1} parent=0
    #allocation2 [shape = 'u8[8192]{0}', space=vmem, size = 0x2000, scoped, tag = 'output window, operand 0, single buffered']
    #allocation3 [shape = 's32[1]{0}', space=sflag, size = 0x4, scoped, tag = 'scoped memory for tpu_custom_call.1']
    %10 = vsyncpa [#allocation3], 0
    // Predicated region
    $region2: #{tpu_custom_call.1} parent=1 // pred_check
      _
    $region3: #{tpu_custom_call.1} parent=1 // pred_check_branch
      %12 = sbr.rel (0) target = $region5
    $region4: #{tpu_custom_call.1} parent=1 // pred_region
      _
    $region5: #{tpu_custom_call.1} parent=1 // pred_fallthru
      _
    // Predicated region
    $region6: #{tpu_custom_call.1} parent=1 // pred_check
      _
    $region7: #{tpu_custom_call.1} parent=1 // pred_check_branch
      %14 = sbr.rel (0) target = $region9
    $region8: #{tpu_custom_call.1} parent=1 // pred_region
      _
    $region9: #{tpu_custom_call.1} parent=1 // pred_fallthru
      _
    // Predicated region
    $region10: #{tpu_custom_call.1} parent=1 // pred_check
      _
    $region11: #{tpu_custom_call.1} parent=1 // pred_check_branch
      %16 = sbr.rel (0) target = $region13
    $region12: #{tpu_custom_call.1} parent=1 // pred_region
      _
    $region13: #{tpu_custom_call.1} parent=1 // pred_fallthru
      _
    // Predicated region
    $region14: #{tpu_custom_call.1} parent=1 // pred_check
      _
    $region15: #{tpu_custom_call.1} parent=1 // pred_check_branch
      %18 = sbr.rel (0) target = $region17
    $region16: #{tpu_custom_call.1} parent=1 // pred_region
      _
    $region17: #{tpu_custom_call.1} parent=1 // pred_fallthru
      _
    // Predicated region
    $region18: #{tpu_custom_call.1} parent=1 // pred_check
      _
    $region19: #{tpu_custom_call.1} parent=1 // pred_check_branch
      %20 = sbr.rel (0) target = $region21
    $region20: #{tpu_custom_call.1} parent=1 // pred_region
      _
    $region21: #{tpu_custom_call.1} parent=1 // pred_fallthru
      _
    %p21 = scmp.eq.s32.totalorder 0, 0
    // Predicated region
    $region22: #{tpu_custom_call.1} parent=1 // pred_check
      %p22 = pneg %p21
    $region23: #{tpu_custom_call.1} parent=1 // pred_check_branch
      %24 = sbr.rel (%p22) target = $region25
    $region24: #{tpu_custom_call.1} parent=1 // pred_region
      %vm25 = vcmask 261120
      %26 = vst.msk [vmem:[#allocation2] sm:$0xff] %vm25, 0.0
      %27 = vst.msk [vmem:[#allocation2 + $0x8] sm:$0xff] %vm25, 0.0
    $region25: #{tpu_custom_call.1} parent=1 // pred_fallthru
      _
    %s28 = smul.u32 0, 72
    %v29 = vlaneseq
    %v30 = vand.u32 %v29, 127
    %v31 = vstv %s28
    %v32 = vadd.s32 %v30, %v31
    %v33 = vld [vmem:[%s0] sm:$0xff]
    %v34 = vld [vmem:[%s0 + $0x8] sm:$0xff]
    %35 = vset.pattern.permute.xlu0 0
    %36 = vperm.xlu0 %35, %v33
    %v37 = vpop.permute.xlu0 %36
    %38 = vset.pattern.permute.xlu0 0
    %39 = vperm.xlu0 %38, %v34
    %v40 = vpop.permute.xlu0 %39
    %vm41 = vcmp.eq.s32.totalorder %v32, %v37
    %vm42 = vcmp.eq.s32.totalorder %v32, %v40
    %v43 = vld [vmem:[%s1] sm:$0xff]
    %v44 = vld [vmem:[%s1 + $0x8] sm:$0xff]
    %45 = vset.pattern.permute.xlu0 0
    %46 = vperm.xlu0 %45, %v43
    %v47 = vpop.permute.xlu0 %46
    %48 = vset.pattern.permute.xlu0 0
    %49 = vperm.xlu0 %48, %v44
    %v50 = vpop.permute.xlu0 %49
    %vm51 = vcmp.eq.s32.totalorder %v32, %v47
    %vm52 = vcmp.eq.s32.totalorder %v32, %v50
    %vm53 = vmor %vm41, %vm51
    %vm54 = vmor %vm42, %vm52
    %v55 = vsel %vm53, 1, 0
    %v56 = vsel %vm54, 1, 0
    %v57 = vcvt.s32.f32 %v55
    %v58 = vcvt.s32.f32 %v56
    %v59 = vld [vmem:[#allocation2] sm:$0xff]
    %v60 = vld [vmem:[#allocation2 + $0x8] sm:$0xff]
    %v61 = vld [vmem:[%s2] sm:$0xff]
    %v62 = vld [vmem:[%s2 + $0x8] sm:$0xff]
    %v63 = vld [vmem:[%s2 + $0x10] sm:$0xff]
    %v64 = vld [vmem:[%s2 + $0x18] sm:$0xff]
    %v65 = vld [vmem:[%s2 + $0x20] sm:$0xff]
    %v66 = vld [vmem:[%s2 + $0x28] sm:$0xff]
    %v67 = vld [vmem:[%s2 + $0x30] sm:$0xff]
    %v68 = vld [vmem:[%s2 + $0x38] sm:$0xff]
    %v69 = vld [vmem:[%s2 + $0x40] sm:$0xff]
    %vm70 = vcmask 588800
    %v72 = vsel %vm70, %v57, 0
    %v75 = vsel %vm70, %v58, 0
    %77 = vmatprep.subr.mxu0 0.0
    %v78 = vand.u32 %v61, 4294901760
    %79 = vmatpush1.msra.mxu0 %v78
    %80 = vmatprep.subr.mxu0 0.0
    %v81 = vand.u32 %v62, 4294901760
    %82 = vmatpush1.msra.mxu0 %v81
    %83 = vmatprep.subr.mxu0 0.0
    %v84 = vand.u32 %v63, 4294901760
    %85 = vmatpush1.msra.mxu0 %v84
    %86 = vmatprep.subr.mxu0 0.0
    %v87 = vand.u32 %v64, 4294901760
    %88 = vmatpush1.msra.mxu0 %v87
    %89 = vmatprep.subr.mxu0 0.0
    %v90 = vand.u32 %v65, 4294901760
    %91 = vmatpush1.msra.mxu0 %v90
    %92 = vmatprep.subr.mxu0 0.0
    %v93 = vand.u32 %v66, 4294901760
    %94 = vmatpush1.msra.mxu0 %v93
    %95 = vmatprep.subr.mxu0 0.0
    %v96 = vand.u32 %v67, 4294901760
    %97 = vmatpush1.msra.mxu0 %v96
    %98 = vmatprep.subr.mxu0 0.0
    %v99 = vand.u32 %v68, 4294901760
    %100 = vmatpush1.msra.mxu0 %v99
    %101 = vmatprep.subr.mxu0 0.0
    %v102 = vand.u32 %v69, 4294901760
    %103 = vmatpush1.msra.mxu0 %v102
    %104 = vmatprep.subr.mxu0 0.0
    %105 = vmatpush1.msra.mxu0 0.0
    %106 = vmatprep.subr.mxu0 0.0
    %107 = vmatpush1.msra.mxu0 0.0
    %108 = vmatprep.subr.mxu0 0.0
    %109 = vmatpush1.msra.mxu0 0.0
    %110 = vmatprep.subr.mxu0 0.0
    %111 = vmatpush1.msra.mxu0 0.0
    %112 = vmatprep.subr.mxu0 0.0
    %113 = vmatpush1.msra.mxu0 0.0
    %114 = vmatprep.subr.mxu0 0.0
    %115 = vmatpush1.msra.mxu0 0.0
    %116 = vmatprep.subr.mxu0 0.0
    %117 = vmatpush1.msra.mxu0 0.0
    %118 = vmatprep.subr.mxu0 0.0
    %119 = vmatpush1.msra.mxu0 0.0
    %120 = vmatprep.subr.mxu0 0.0
    %121 = vmatpush1.msra.mxu0 0.0
    %122 = vmatprep.subr.mxu0 0.0
    %123 = vmatpush1.msra.mxu0 0.0
    %124 = vmatprep.subr.mxu0 0.0
    %125 = vmatpush1.msra.mxu0 0.0
    %126 = vmatprep.subr.mxu0 0.0
    %127 = vmatpush1.msra.mxu0 0.0
    %128 = vmatprep.subr.mxu0 0.0
    %129 = vmatpush1.msra.mxu0 0.0
    %130 = vmatprep.subr.mxu0 0.0
    %131 = vmatpush1.msra.mxu0 0.0
    %132 = vmatprep.subr.mxu0 0.0
    %133 = vmatpush1.msra.mxu0 0.0
    %134 = vmatprep.subr.mxu0 0.0
    %135 = vmatpush1.msra.mxu0 0.0
    %136 = vmatprep.subr.mxu0 0.0
    %137 = vmatpush1.msra.mxu0 0.0
    %138 = vmatprep.subr.mxu0 0.0
    %139 = vmatpush1.msra.mxu0 0.0
    %140 = vmatprep.subr.mxu0 0.0
    %141 = vmatpush1.msra.mxu0 0.0
    %142 = vmatprep.subr.mxu0 0.0
    %143 = vmatpush1.msra.mxu0 0.0
    %144 = vmatprep.subr.mxu0 0.0
    %145 = vmatpush1.msra.mxu0 0.0
    %146 = vmatprep.subr.mxu0 0.0
    %147 = vmatpush1.msra.mxu0 0.0
    %148 = vmatprep.subr.mxu0 0.0
    %149 = vmatpush1.msra.mxu0 0.0
    %150 = vmatprep.mubr.f32.mxu0 0.0
    %v151 = vand.u32 %v72, 4294901760
    %v152 = vsub.f32 %v72, %v151
    %v153 = vand.u32 %v152, 4294901760
    %v154 = vsub.f32 %v152, %v153
    %v155 = vand.u32 %v154, 4294901760
    %156 = vmatmul.mubr.f32.gmra.mrb[0].mxu0 %v155
    %v157 = vpop.f32.mrb[0].mxu0
    %v158 = vadd.f32 0.0, %v157
    %v159 = vpop.f32.mrb[0].mxu0
    %160 = vmatprep.mubr.f32.mxu0 0.0
    %v161 = vand.u32 %v75, 4294901760
    %v162 = vsub.f32 %v75, %v161
    %v163 = vand.u32 %v162, 4294901760
    %v164 = vsub.f32 %v162, %v163
    %v165 = vand.u32 %v164, 4294901760
    %166 = vmatmul.mubr.f32.gmra.mrb[0].mxu0 %v165
    %v167 = vpop.f32.mrb[0].mxu0
    %v168 = vadd.f32 0.0, %v167
    %v169 = vpop.f32.mrb[0].mxu0
    %170 = vdwg.mxu0
    %171 = vmatprep.subr.mxu0 0.0
    %v172 = vand.u32 %v61, 4294901760
    %v173 = vsub.f32 %v61, %v172
    %v174 = vand.u32 %v173, 4294901760
    %v175 = vsub.f32 %v173, %v174
    %v176 = vand.u32 %v175, 4294901760
    %177 = vmatpush1.msra.mxu0 %v176
    %178 = vmatprep.subr.mxu0 0.0
    %v179 = vand.u32 %v62, 4294901760
    %v180 = vsub.f32 %v62, %v179
    %v181 = vand.u32 %v180, 4294901760
    %v182 = vsub.f32 %v180, %v181
    %v183 = vand.u32 %v182, 4294901760
    %184 = vmatpush1.msra.mxu0 %v183
    %185 = vmatprep.subr.mxu0 0.0
    %v186 = vand.u32 %v63, 4294901760
    %v187 = vsub.f32 %v63, %v186
    %v188 = vand.u32 %v187, 4294901760
    %v189 = vsub.f32 %v187, %v188
    %v190 = vand.u32 %v189, 4294901760
    %191 = vmatpush1.msra.mxu0 %v190
    %192 = vmatprep.subr.mxu0 0.0
    %v193 = vand.u32 %v64, 4294901760
    %v194 = vsub.f32 %v64, %v193
    %v195 = vand.u32 %v194, 4294901760
    %v196 = vsub.f32 %v194, %v195
    %v197 = vand.u32 %v196, 4294901760
    %198 = vmatpush1.msra.mxu0 %v197
    %199 = vmatprep.subr.mxu0 0.0
    %v200 = vand.u32 %v65, 4294901760
    %v201 = vsub.f32 %v65, %v200
    %v202 = vand.u32 %v201, 4294901760
    %v203 = vsub.f32 %v201, %v202
    %v204 = vand.u32 %v203, 4294901760
    %205 = vmatpush1.msra.mxu0 %v204
    %206 = vmatprep.subr.mxu0 0.0
    %v207 = vand.u32 %v66, 4294901760
    %v208 = vsub.f32 %v66, %v207
    %v209 = vand.u32 %v208, 4294901760
    %v210 = vsub.f32 %v208, %v209
    %v211 = vand.u32 %v210, 4294901760
    %212 = vmatpush1.msra.mxu0 %v211
    %213 = vmatprep.subr.mxu0 0.0
    %v214 = vand.u32 %v67, 4294901760
    %v215 = vsub.f32 %v67, %v214
    %v216 = vand.u32 %v215, 4294901760
    %v217 = vsub.f32 %v215, %v216
    %v218 = vand.u32 %v217, 4294901760
    %219 = vmatpush1.msra.mxu0 %v218
    %220 = vmatprep.subr.mxu0 0.0
    %v221 = vand.u32 %v68, 4294901760
    %v222 = vsub.f32 %v68, %v221
    %v223 = vand.u32 %v222, 4294901760
    %v224 = vsub.f32 %v222, %v223
    %v225 = vand.u32 %v224, 4294901760
    %226 = vmatpush1.msra.mxu0 %v225
    %227 = vmatprep.subr.mxu0 0.0
    %v228 = vand.u32 %v69, 4294901760
    %v229 = vsub.f32 %v69, %v228
    %v230 = vand.u32 %v229, 4294901760
    %v231 = vsub.f32 %v229, %v230
    %v232 = vand.u32 %v231, 4294901760
    %233 = vmatpush1.msra.mxu0 %v232
    %234 = vmatprep.subr.mxu0 0.0
    %235 = vmatpush1.msra.mxu0 0.0
    %236 = vmatprep.subr.mxu0 0.0
    %237 = vmatpush1.msra.mxu0 0.0
    %238 = vmatprep.subr.mxu0 0.0
    %239 = vmatpush1.msra.mxu0 0.0
    %240 = vmatprep.subr.mxu0 0.0
    %241 = vmatpush1.msra.mxu0 0.0
    %242 = vmatprep.subr.mxu0 0.0
    %243 = vmatpush1.msra.mxu0 0.0
    %244 = vmatprep.subr.mxu0 0.0
    %245 = vmatpush1.msra.mxu0 0.0
    %246 = vmatprep.subr.mxu0 0.0
    %247 = vmatpush1.msra.mxu0 0.0
    %248 = vmatprep.subr.mxu0 0.0
    %249 = vmatpush1.msra.mxu0 0.0
    %250 = vmatprep.subr.mxu0 0.0
    %251 = vmatpush1.msra.mxu0 0.0
    %252 = vmatprep.subr.mxu0 0.0
    %253 = vmatpush1.msra.mxu0 0.0
    %254 = vmatprep.subr.mxu0 0.0
    %255 = vmatpush1.msra.mxu0 0.0
    %256 = vmatprep.subr.mxu0 0.0
    %257 = vmatpush1.msra.mxu0 0.0
    %258 = vmatprep.subr.mxu0 0.0
    %259 = vmatpush1.msra.mxu0 0.0
    %260 = vmatprep.subr.mxu0 0.0
    %261 = vmatpush1.msra.mxu0 0.0
    %262 = vmatprep.subr.mxu0 0.0
    %263 = vmatpush1.msra.mxu0 0.0
    %264 = vmatprep.subr.mxu0 0.0
    %265 = vmatpush1.msra.mxu0 0.0
    %266 = vmatprep.subr.mxu0 0.0
    %267 = vmatpush1.msra.mxu0 0.0
    %268 = vmatprep.subr.mxu0 0.0
    %269 = vmatpush1.msra.mxu0 0.0
    %270 = vmatprep.subr.mxu0 0.0
    %271 = vmatpush1.msra.mxu0 0.0
    %272 = vmatprep.subr.mxu0 0.0
    %273 = vmatpush1.msra.mxu0 0.0
    %274 = vmatprep.subr.mxu0 0.0
    %275 = vmatpush1.msra.mxu0 0.0
    %276 = vmatprep.subr.mxu0 0.0
    %277 = vmatpush1.msra.mxu0 0.0
    %278 = vmatprep.subr.mxu0 0.0
    %279 = vmatpush1.msra.mxu0 0.0
    %280 = vmatprep.mubr.f32.mxu0 0.0
    %v281 = vand.u32 %v72, 4294901760
    %282 = vmatmul.mubr.f32.gmra.mrb[0].mxu0 %v281
    %v283 = vpop.f32.mrb[0].mxu0
    %v284 = vadd.f32 %v158, %v283
    %v285 = vpop.f32.mrb[0].mxu0
    %286 = vmatprep.mubr.f32.mxu0 0.0
    %v287 = vand.u32 %v75, 4294901760
    %288 = vmatmul.mubr.f32.gmra.mrb[0].mxu0 %v287
    %v289 = vpop.f32.mrb[0].mxu0
    %v290 = vadd.f32 %v168, %v289
    %v291 = vpop.f32.mrb[0].mxu0
    %292 = vdwg.mxu0
    %293 = vmatprep.subr.mxu0 0.0
    %v294 = vand.u32 %v61, 4294901760
    %v295 = vsub.f32 %v61, %v294
    %296 = vmatpush1.msra.mxu0 %v295
    %297 = vmatprep.subr.mxu0 0.0
    %v298 = vand.u32 %v62, 4294901760
    %v299 = vsub.f32 %v62, %v298
    %300 = vmatpush1.msra.mxu0 %v299
    %301 = vmatprep.subr.mxu0 0.0
    %v302 = vand.u32 %v63, 4294901760
    %v303 = vsub.f32 %v63, %v302
    %304 = vmatpush1.msra.mxu0 %v303
    %305 = vmatprep.subr.mxu0 0.0
    %v306 = vand.u32 %v64, 4294901760
    %v307 = vsub.f32 %v64, %v306
    %308 = vmatpush1.msra.mxu0 %v307
    %309 = vmatprep.subr.mxu0 0.0
    %v310 = vand.u32 %v65, 4294901760
    %v311 = vsub.f32 %v65, %v310
    %312 = vmatpush1.msra.mxu0 %v311
    %313 = vmatprep.subr.mxu0 0.0
    %v314 = vand.u32 %v66, 4294901760
    %v315 = vsub.f32 %v66, %v314
    %316 = vmatpush1.msra.mxu0 %v315
    %317 = vmatprep.subr.mxu0 0.0
    %v318 = vand.u32 %v67, 4294901760
    %v319 = vsub.f32 %v67, %v318
    %320 = vmatpush1.msra.mxu0 %v319
    %321 = vmatprep.subr.mxu0 0.0
    %v322 = vand.u32 %v68, 4294901760
    %v323 = vsub.f32 %v68, %v322
    %324 = vmatpush1.msra.mxu0 %v323
    %325 = vmatprep.subr.mxu0 0.0
    %v326 = vand.u32 %v69, 4294901760
    %v327 = vsub.f32 %v69, %v326
    %328 = vmatpush1.msra.mxu0 %v327
    %329 = vmatprep.subr.mxu0 0.0
    %330 = vmatpush1.msra.mxu0 0.0
    %331 = vmatprep.subr.mxu0 0.0
    %332 = vmatpush1.msra.mxu0 0.0
    %333 = vmatprep.subr.mxu0 0.0
    %334 = vmatpush1.msra.mxu0 0.0
    %335 = vmatprep.subr.mxu0 0.0
    %336 = vmatpush1.msra.mxu0 0.0
    %337 = vmatprep.subr.mxu0 0.0
    %338 = vmatpush1.msra.mxu0 0.0
    %339 = vmatprep.subr.mxu0 0.0
    %340 = vmatpush1.msra.mxu0 0.0
    %341 = vmatprep.subr.mxu0 0.0
    %342 = vmatpush1.msra.mxu0 0.0
    %343 = vmatprep.subr.mxu0 0.0
    %344 = vmatpush1.msra.mxu0 0.0
    %345 = vmatprep.subr.mxu0 0.0
    %346 = vmatpush1.msra.mxu0 0.0
    %347 = vmatprep.subr.mxu0 0.0
    %348 = vmatpush1.msra.mxu0 0.0
    %349 = vmatprep.subr.mxu0 0.0
    %350 = vmatpush1.msra.mxu0 0.0
    %351 = vmatprep.subr.mxu0 0.0
    %352 = vmatpush1.msra.mxu0 0.0
    %353 = vmatprep.subr.mxu0 0.0
    %354 = vmatpush1.msra.mxu0 0.0
    %355 = vmatprep.subr.mxu0 0.0
    %356 = vmatpush1.msra.mxu0 0.0
    %357 = vmatprep.subr.mxu0 0.0
    %358 = vmatpush1.msra.mxu0 0.0
    %359 = vmatprep.subr.mxu0 0.0
    %360 = vmatpush1.msra.mxu0 0.0
    %361 = vmatprep.subr.mxu0 0.0
    %362 = vmatpush1.msra.mxu0 0.0
    %363 = vmatprep.subr.mxu0 0.0
    %364 = vmatpush1.msra.mxu0 0.0
    %365 = vmatprep.subr.mxu0 0.0
    %366 = vmatpush1.msra.mxu0 0.0
    %367 = vmatprep.subr.mxu0 0.0
    %368 = vmatpush1.msra.mxu0 0.0
    %369 = vmatprep.subr.mxu0 0.0
    %370 = vmatpush1.msra.mxu0 0.0
    %371 = vmatprep.subr.mxu0 0.0
    %372 = vmatpush1.msra.mxu0 0.0
    %373 = vmatprep.subr.mxu0 0.0
    %374 = vmatpush1.msra.mxu0 0.0
    %375 = vmatprep.mubr.f32.mxu0 0.0
    %v376 = vand.u32 %v72, 4294901760
    %v377 = vsub.f32 %v72, %v376
    %378 = vmatmul.mubr.f32.gmra.mrb[0].mxu0 %v377
    %v379 = vpop.f32.mrb[0].mxu0
    %v380 = vadd.f32 %v284, %v379
    %v381 = vpop.f32.mrb[0].mxu0
    %382 = vmatprep.mubr.f32.mxu0 0.0
    %v383 = vand.u32 %v75, 4294901760
    %v384 = vsub.f32 %v75, %v383
    %385 = vmatmul.mubr.f32.gmra.mrb[0].mxu0 %v384
    %v386 = vpop.f32.mrb[0].mxu0
    %v387 = vadd.f32 %v290, %v386
    %v388 = vpop.f32.mrb[0].mxu0
    %389 = vdwg.mxu0
    %390 = vmatprep.subr.mxu0 0.0
    %v391 = vand.u32 %v61, 4294901760
    %392 = vmatpush1.msra.mxu0 %v391
    %393 = vmatprep.subr.mxu0 0.0
    %v394 = vand.u32 %v62, 4294901760
    %395 = vmatpush1.msra.mxu0 %v394
    %396 = vmatprep.subr.mxu0 0.0
    %v397 = vand.u32 %v63, 4294901760
    %398 = vmatpush1.msra.mxu0 %v397
    %399 = vmatprep.subr.mxu0 0.0
    %v400 = vand.u32 %v64, 4294901760
    %401 = vmatpush1.msra.mxu0 %v400
    %402 = vmatprep.subr.mxu0 0.0
    %v403 = vand.u32 %v65, 4294901760
    %404 = vmatpush1.msra.mxu0 %v403
    %405 = vmatprep.subr.mxu0 0.0
    %v406 = vand.u32 %v66, 4294901760
    %407 = vmatpush1.msra.mxu0 %v406
    %408 = vmatprep.subr.mxu0 0.0
    %v409 = vand.u32 %v67, 4294901760
    %410 = vmatpush1.msra.mxu0 %v409
    %411 = vmatprep.subr.mxu0 0.0
    %v412 = vand.u32 %v68, 4294901760
    %413 = vmatpush1.msra.mxu0 %v412
    %414 = vmatprep.subr.mxu0 0.0
    %v415 = vand.u32 %v69, 4294901760
    %416 = vmatpush1.msra.mxu0 %v415
    %417 = vmatprep.subr.mxu0 0.0
    %418 = vmatpush1.msra.mxu0 0.0
    %419 = vmatprep.subr.mxu0 0.0
    %420 = vmatpush1.msra.mxu0 0.0
    %421 = vmatprep.subr.mxu0 0.0
    %422 = vmatpush1.msra.mxu0 0.0
    %423 = vmatprep.subr.mxu0 0.0
    %424 = vmatpush1.msra.mxu0 0.0
    %425 = vmatprep.subr.mxu0 0.0
    %426 = vmatpush1.msra.mxu0 0.0
    %427 = vmatprep.subr.mxu0 0.0
    %428 = vmatpush1.msra.mxu0 0.0
    %429 = vmatprep.subr.mxu0 0.0
    %430 = vmatpush1.msra.mxu0 0.0
    %431 = vmatprep.subr.mxu0 0.0
    %432 = vmatpush1.msra.mxu0 0.0
    %433 = vmatprep.subr.mxu0 0.0
    %434 = vmatpush1.msra.mxu0 0.0
    %435 = vmatprep.subr.mxu0 0.0
    %436 = vmatpush1.msra.mxu0 0.0
    %437 = vmatprep.subr.mxu0 0.0
    %438 = vmatpush1.msra.mxu0 0.0
    %439 = vmatprep.subr.mxu0 0.0
    %440 = vmatpush1.msra.mxu0 0.0
    %441 = vmatprep.subr.mxu0 0.0
    %442 = vmatpush1.msra.mxu0 0.0
    %443 = vmatprep.subr.mxu0 0.0
    %444 = vmatpush1.msra.mxu0 0.0
    %445 = vmatprep.subr.mxu0 0.0
    %446 = vmatpush1.msra.mxu0 0.0
    %447 = vmatprep.subr.mxu0 0.0
    %448 = vmatpush1.msra.mxu0 0.0
    %449 = vmatprep.subr.mxu0 0.0
    %450 = vmatpush1.msra.mxu0 0.0
    %451 = vmatprep.subr.mxu0 0.0
    %452 = vmatpush1.msra.mxu0 0.0
    %453 = vmatprep.subr.mxu0 0.0
    %454 = vmatpush1.msra.mxu0 0.0
    %455 = vmatprep.subr.mxu0 0.0
    %456 = vmatpush1.msra.mxu0 0.0
    %457 = vmatprep.subr.mxu0 0.0
    %458 = vmatpush1.msra.mxu0 0.0
    %459 = vmatprep.subr.mxu0 0.0
    %460 = vmatpush1.msra.mxu0 0.0
    %461 = vmatprep.subr.mxu0 0.0
    %462 = vmatpush1.msra.mxu0 0.0
    %463 = vmatprep.mubr.f32.mxu0 0.0
    %v464 = vand.u32 %v72, 4294901760
    %v465 = vsub.f32 %v72, %v464
    %v466 = vand.u32 %v465, 4294901760
    %467 = vmatmul.mubr.f32.gmra.mrb[0].mxu0 %v466
    %v468 = vpop.f32.mrb[0].mxu0
    %v469 = vadd.f32 %v380, %v468
    %v470 = vpop.f32.mrb[0].mxu0
    %471 = vmatprep.mubr.f32.mxu0 0.0
    %v472 = vand.u32 %v75, 4294901760
    %v473 = vsub.f32 %v75, %v472
    %v474 = vand.u32 %v473, 4294901760
    %475 = vmatmul.mubr.f32.gmra.mrb[0].mxu0 %v474
    %v476 = vpop.f32.mrb[0].mxu0
    %v477 = vadd.f32 %v387, %v476
    %v478 = vpop.f32.mrb[0].mxu0
    %479 = vdwg.mxu0
    %480 = vmatprep.subr.mxu0 0.0
    %v481 = vand.u32 %v61, 4294901760
    %v482 = vsub.f32 %v61, %v481
    %v483 = vand.u32 %v482, 4294901760
    %484 = vmatpush1.msra.mxu0 %v483
    %485 = vmatprep.subr.mxu0 0.0
    %v486 = vand.u32 %v62, 4294901760
    %v487 = vsub.f32 %v62, %v486
    %v488 = vand.u32 %v487, 4294901760
    %489 = vmatpush1.msra.mxu0 %v488
    %490 = vmatprep.subr.mxu0 0.0
    %v491 = vand.u32 %v63, 4294901760
    %v492 = vsub.f32 %v63, %v491
    %v493 = vand.u32 %v492, 4294901760
    %494 = vmatpush1.msra.mxu0 %v493
    %495 = vmatprep.subr.mxu0 0.0
    %v496 = vand.u32 %v64, 4294901760
    %v497 = vsub.f32 %v64, %v496
    %v498 = vand.u32 %v497, 4294901760
    %499 = vmatpush1.msra.mxu0 %v498
    %500 = vmatprep.subr.mxu0 0.0
    %v501 = vand.u32 %v65, 4294901760
    %v502 = vsub.f32 %v65, %v501
    %v503 = vand.u32 %v502, 4294901760
    %504 = vmatpush1.msra.mxu0 %v503
    %505 = vmatprep.subr.mxu0 0.0
    %v506 = vand.u32 %v66, 4294901760
    %v507 = vsub.f32 %v66, %v506
    %v508 = vand.u32 %v507, 4294901760
    %509 = vmatpush1.msra.mxu0 %v508
    %510 = vmatprep.subr.mxu0 0.0
    %v511 = vand.u32 %v67, 4294901760
    %v512 = vsub.f32 %v67, %v511
    %v513 = vand.u32 %v512, 4294901760
    %514 = vmatpush1.msra.mxu0 %v513
    %515 = vmatprep.subr.mxu0 0.0
    %v516 = vand.u32 %v68, 4294901760
    %v517 = vsub.f32 %v68, %v516
    %v518 = vand.u32 %v517, 4294901760
    %519 = vmatpush1.msra.mxu0 %v518
    %520 = vmatprep.subr.mxu0 0.0
    %v521 = vand.u32 %v69, 4294901760
    %v522 = vsub.f32 %v69, %v521
    %v523 = vand.u32 %v522, 4294901760
    %524 = vmatpush1.msra.mxu0 %v523
    %525 = vmatprep.subr.mxu0 0.0
    %526 = vmatpush1.msra.mxu0 0.0
    %527 = vmatprep.subr.mxu0 0.0
    %528 = vmatpush1.msra.mxu0 0.0
    %529 = vmatprep.subr.mxu0 0.0
    %530 = vmatpush1.msra.mxu0 0.0
    %531 = vmatprep.subr.mxu0 0.0
    %532 = vmatpush1.msra.mxu0 0.0
    %533 = vmatprep.subr.mxu0 0.0
    %534 = vmatpush1.msra.mxu0 0.0
    %535 = vmatprep.subr.mxu0 0.0
    %536 = vmatpush1.msra.mxu0 0.0
    %537 = vmatprep.subr.mxu0 0.0
    %538 = vmatpush1.msra.mxu0 0.0
    %539 = vmatprep.subr.mxu0 0.0
    %540 = vmatpush1.msra.mxu0 0.0
    %541 = vmatprep.subr.mxu0 0.0
    %542 = vmatpush1.msra.mxu0 0.0
    %543 = vmatprep.subr.mxu0 0.0
    %544 = vmatpush1.msra.mxu0 0.0
    %545 = vmatprep.subr.mxu0 0.0
    %546 = vmatpush1.msra.mxu0 0.0
    %547 = vmatprep.subr.mxu0 0.0
    %548 = vmatpush1.msra.mxu0 0.0
    %549 = vmatprep.subr.mxu0 0.0
    %550 = vmatpush1.msra.mxu0 0.0
    %551 = vmatprep.subr.mxu0 0.0
    %552 = vmatpush1.msra.mxu0 0.0
    %553 = vmatprep.subr.mxu0 0.0
    %554 = vmatpush1.msra.mxu0 0.0
    %555 = vmatprep.subr.mxu0 0.0
    %556 = vmatpush1.msra.mxu0 0.0
    %557 = vmatprep.subr.mxu0 0.0
    %558 = vmatpush1.msra.mxu0 0.0
    %559 = vmatprep.subr.mxu0 0.0
    %560 = vmatpush1.msra.mxu0 0.0
    %561 = vmatprep.subr.mxu0 0.0
    %562 = vmatpush1.msra.mxu0 0.0
    %563 = vmatprep.subr.mxu0 0.0
    %564 = vmatpush1.msra.mxu0 0.0
    %565 = vmatprep.subr.mxu0 0.0
    %566 = vmatpush1.msra.mxu0 0.0
    %567 = vmatprep.subr.mxu0 0.0
    %568 = vmatpush1.msra.mxu0 0.0
    %569 = vmatprep.subr.mxu0 0.0
    %570 = vmatpush1.msra.mxu0 0.0
    %571 = vmatprep.mubr.f32.mxu0 0.0
    %v572 = vand.u32 %v72, 4294901760
    %573 = vmatmul.mubr.f32.gmra.mrb[0].mxu0 %v572
    %v574 = vpop.f32.mrb[0].mxu0
    %v575 = vadd.f32 %v469, %v574
    %v576 = vpop.f32.mrb[0].mxu0
    %577 = vmatprep.mubr.f32.mxu0 0.0
    %v578 = vand.u32 %v75, 4294901760
    %579 = vmatmul.mubr.f32.gmra.mrb[0].mxu0 %v578
    %v580 = vpop.f32.mrb[0].mxu0
    %v581 = vadd.f32 %v477, %v580
    %v582 = vpop.f32.mrb[0].mxu0
    %583 = vdwg.mxu0
    %584 = vmatprep.subr.mxu0 0.0
    %v585 = vand.u32 %v61, 4294901760
    %586 = vmatpush1.msra.mxu0 %v585
    %587 = vmatprep.subr.mxu0 0.0
    %v588 = vand.u32 %v62, 4294901760
    %589 = vmatpush1.msra.mxu0 %v588
    %590 = vmatprep.subr.mxu0 0.0
    %v591 = vand.u32 %v63, 4294901760
    %592 = vmatpush1.msra.mxu0 %v591
    %593 = vmatprep.subr.mxu0 0.0
    %v594 = vand.u32 %v64, 4294901760
    %595 = vmatpush1.msra.mxu0 %v594
    %596 = vmatprep.subr.mxu0 0.0
    %v597 = vand.u32 %v65, 4294901760
    %598 = vmatpush1.msra.mxu0 %v597
    %599 = vmatprep.subr.mxu0 0.0
    %v600 = vand.u32 %v66, 4294901760
    %601 = vmatpush1.msra.mxu0 %v600
    %602 = vmatprep.subr.mxu0 0.0
    %v603 = vand.u32 %v67, 4294901760
    %604 = vmatpush1.msra.mxu0 %v603
    %605 = vmatprep.subr.mxu0 0.0
    %v606 = vand.u32 %v68, 4294901760
    %607 = vmatpush1.msra.mxu0 %v606
    %608 = vmatprep.subr.mxu0 0.0
    %v609 = vand.u32 %v69, 4294901760
    %610 = vmatpush1.msra.mxu0 %v609
    %611 = vmatprep.subr.mxu0 0.0
    %612 = vmatpush1.msra.mxu0 0.0
    %613 = vmatprep.subr.mxu0 0.0
    %614 = vmatpush1.msra.mxu0 0.0
    %615 = vmatprep.subr.mxu0 0.0
    %616 = vmatpush1.msra.mxu0 0.0
    %617 = vmatprep.subr.mxu0 0.0
    %618 = vmatpush1.msra.mxu0 0.0
    %619 = vmatprep.subr.mxu0 0.0
    %620 = vmatpush1.msra.mxu0 0.0
    %621 = vmatprep.subr.mxu0 0.0
    %622 = vmatpush1.msra.mxu0 0.0
    %623 = vmatprep.subr.mxu0 0.0
    %624 = vmatpush1.msra.mxu0 0.0
    %625 = vmatprep.subr.mxu0 0.0
    %626 = vmatpush1.msra.mxu0 0.0
    %627 = vmatprep.subr.mxu0 0.0
    %628 = vmatpush1.msra.mxu0 0.0
    %629 = vmatprep.subr.mxu0 0.0
    %630 = vmatpush1.msra.mxu0 0.0
    %631 = vmatprep.subr.mxu0 0.0
    %632 = vmatpush1.msra.mxu0 0.0
    %633 = vmatprep.subr.mxu0 0.0
    %634 = vmatpush1.msra.mxu0 0.0
    %635 = vmatprep.subr.mxu0 0.0
    %636 = vmatpush1.msra.mxu0 0.0
    %637 = vmatprep.subr.mxu0 0.0
    %638 = vmatpush1.msra.mxu0 0.0
    %639 = vmatprep.subr.mxu0 0.0
    %640 = vmatpush1.msra.mxu0 0.0
    %641 = vmatprep.subr.mxu0 0.0
    %642 = vmatpush1.msra.mxu0 0.0
    %643 = vmatprep.subr.mxu0 0.0
    %644 = vmatpush1.msra.mxu0 0.0
    %645 = vmatprep.subr.mxu0 0.0
    %646 = vmatpush1.msra.mxu0 0.0
    %647 = vmatprep.subr.mxu0 0.0
    %648 = vmatpush1.msra.mxu0 0.0
    %649 = vmatprep.subr.mxu0 0.0
    %650 = vmatpush1.msra.mxu0 0.0
    %651 = vmatprep.subr.mxu0 0.0
    %652 = vmatpush1.msra.mxu0 0.0
    %653 = vmatprep.subr.mxu0 0.0
    %654 = vmatpush1.msra.mxu0 0.0
    %655 = vmatprep.subr.mxu0 0.0
    %656 = vmatpush1.msra.mxu0 0.0
    %657 = vmatprep.mubr.f32.mxu0 0.0
    %v658 = vand.u32 %v72, 4294901760
    %659 = vmatmul.mubr.f32.gmra.mrb[0].mxu0 %v658
    %v660 = vpop.f32.mrb[0].mxu0
    %v661 = vadd.f32 %v575, %v660
    %v662 = vpop.f32.mrb[0].mxu0
    %663 = vmatprep.mubr.f32.mxu0 0.0
    %v664 = vand.u32 %v75, 4294901760
    %665 = vmatmul.mubr.f32.gmra.mrb[0].mxu0 %v664
    %v666 = vpop.f32.mrb[0].mxu0
    %v667 = vadd.f32 %v581, %v666
    %v668 = vpop.f32.mrb[0].mxu0
    %669 = vdwg.mxu0
    %v670 = vadd.f32 %v59, %v661
    %v671 = vadd.f32 %v60, %v667
    %vm672 = vcmask 261120
    %673 = vst.msk [vmem:[#allocation2] sm:$0xff] %vm672, %v670
    %674 = vst.msk [vmem:[#allocation2 + $0x8] sm:$0xff] %vm672, %v671
    // Predicated region
    $region26: #{tpu_custom_call.1} parent=1 // pred_check
      %p675 = pneg %p21
    $region27: #{tpu_custom_call.1} parent=1 // pred_check_branch
      %677 = sbr.rel (%p675) target = $region29
    $region28: #{tpu_custom_call.1} parent=1 // pred_region
      %v678 = vld [vmem:[#allocation2] sm:$0xff]
      %v679 = vld [vmem:[#allocation2 + $0x8] sm:$0xff]
      %v680 = vsel %vm672, %v678, 0.0
      %681 = vadd.xlane.f32.xlu0 %v680
      %v682 = vpop.xlane.xlu0 %681
      %v683 = vsel %vm672, %v679, 0.0
      %684 = vadd.xlane.f32.xlu0 %v683
      %v685 = vpop.xlane.xlu0 %684
      %v686 = vrcp.pop 32.0
      %v687 = vmul.f32 %v682, %v686
      %v688 = vmul.f32 %v685, %v686
      %v689 = vsub.f32 %v678, %v687
      %v690 = vsub.f32 %v679, %v688
      %v691 = vmul.f32 %v689, %v689
      %v692 = vmul.f32 %v690, %v690
      %v693 = vsel %vm672, %v691, 0.0
      %694 = vadd.xlane.f32.xlu0 %v693
      %v695 = vpop.xlane.xlu0 %694
      %v696 = vsel %vm672, %v692, 0.0
      %697 = vadd.xlane.f32.xlu0 %v696
      %v698 = vpop.xlane.xlu0 %697
      %v699 = vmul.f32 %v695, %v686
      %v700 = vmul.f32 %v698, %v686
      %v701 = vadd.f32 %v699, 1e-12
      %v702 = vadd.f32 %v700, 1e-12
      %v703 = vrsqrt.pop %v701
      %v704 = vrsqrt.pop %v702
      %v705 = vmul.f32 %v689, %v703
      %v706 = vmul.f32 %v690, %v704
      %v707 = vld [vmem:[%s3] sm:$0x1]
      %v709 = vlaneseq
      %v710 = vshrl.u32 %v709, 7
      %v711 = vsub.s32 0, %v710
      %v712 = vrot.slane %v707, %v711
      %v714 = vmul.f32 %v712, %v705
      %v715 = vmul.f32 %v712, %v706
      %v716 = vld [vmem:[%s4] sm:$0x1]
      %v718 = vlaneseq
      %v719 = vshrl.u32 %v718, 7
      %v720 = vsub.s32 0, %v719
      %v721 = vrot.slane %v716, %v720
      %v723 = vadd.f32 %v714, %v721
      %v724 = vadd.f32 %v715, %v721
      %725 = vst.msk [vmem:[#allocation2] sm:$0xff] %vm672, %v723
      %726 = vst.msk [vmem:[#allocation2 + $0x8] sm:$0xff] %vm672, %v724
    $region29: #{tpu_custom_call.1} parent=1 // pred_fallthru
      _
    // Predicated region
    $region30: #{tpu_custom_call.1} parent=1 // pred_check
      _
    $region31: #{tpu_custom_call.1} parent=1 // pred_check_branch
      %728 = sbr.rel (0) target = $region33
    $region32: #{tpu_custom_call.1} parent=1 // pred_region
      %s730 = ssub.s32 256, 256
      %731 = vsyncadd [#allocation3], %s730
      %s732 = sshll.u32 [#allocation2], 4
      %s733 = int_to_ptr.vmem [resolvable:$true] %s732
      %738 = dma.vmem_to_hbm [thread:$0]  %s733, 256, %s5, [#allocation3], 128, 128, 8
    $region33: #{tpu_custom_call.1} parent=1 // pred_fallthru
      _
    // Predicated region
    $region34: #{tpu_custom_call.1} parent=1 // pred_check
      _
    $region35: #{tpu_custom_call.1} parent=1 // pred_check_branch
      %740 = sbr.rel (0) target = $region37
    $region36: #{tpu_custom_call.1} parent=1 // pred_region
      %741 = dma.done [#allocation3], 256
    $region37: #{tpu_custom_call.1} parent=1 // pred_fallthru
      _
    %742 = vsyncpa [#allocation3], 1

</llo_original>
